<compile_context>
chip_gen: v5e
topology: v5e:2x2
jax: 0.10.0
libtpu: 0.0.40
codegen_flags: <defaults>
</compile_context>

<pallas_src>
import functools

import jax
import jax.numpy as jnp
from jax import lax
from jax.experimental import pallas as pl
from jax.experimental.pallas import tpu as pltpu

EPS = 1e-5
# Explicit VMEM budget (fits v5e/v6e 128 MiB and v7x 64 MiB physical).
_VMEM_LIMIT = 64 * 1024 * 1024


# ---------------------------------------------------------------------------
# Kernels
# ---------------------------------------------------------------------------
def _mm_stats_kernel(x_ref, w_ref, scale_ref, shift_ref,
                     o_ref, sum_ref, ssq_ref,
                     *, apply_prologue, m_total, tm):
    """1x1 conv as matmul.  Optionally applies BN(prev)+ReLU to its input
    (prologue fusion) and always emits per-block channel sum / sum-of-squares
    of its raw output (so the next BN never re-reads this activation)."""
    x = x_ref[...]                                        # (tm, Cin) f32
    if apply_prologue:
        # fused BN of the previous layer + ReLU
        x = jnp.maximum(x * scale_ref[...] + shift_ref[...], 0.0)
    if m_total % tm != 0:
        # masked ragged tail: keeps both the MXU input and the BN stats clean
        row = tm * pl.program_id(0) + lax.broadcasted_iota(jnp.int32, (tm, 1), 0)
        x = jnp.where(row < m_total, x, 0.0)
    y = jnp.dot(x, w_ref[...], preferred_element_type=jnp.float32)
    o_ref[...] = y.astype(o_ref.dtype)
    sum_ref[...] = jnp.sum(y, axis=0, keepdims=True)
    ssq_ref[...] = jnp.sum(y * y, axis=0, keepdims=True)


def _conv3x3_fused_kernel(x_ref, w_ref, scale_ref, shift_ref,
                          o_ref, sum_ref, ssq_ref, panel_ref,
                          *, stride, dilation, th, wout, pad,
                          h_valid, w_valid, rows_in):
    """3x3 conv on a tile of `th` output rows of one batch element.

    x_ref   : (Hp, Wp, Cin) padded *raw* conv1 output, resident across row tiles
    w_ref   : (3, 3*Cin, Cout) weights with the kw taps folded into K
    scale/shift : (1, Cin) BN params of the previous layer (fused prologue)
    o_ref   : (th, wout, Cout) raw conv2 output tile
    sum/ssq : (1, Cout) per-block BN statistics of the raw output
    panel_ref : VMEM scratch (th*wout, 3*Cin) wide-K im2col panel
    """
    j = pl.program_id(1)
    cin = x_ref.shape[2]
    cout = w_ref.shape[2]
    r0 = j * (th * stride)                                # padded-row offset

    xt = x_ref[pl.ds(r0, rows_in)]                        # (rows_in, Wp, Cin)
    wp = xt.shape[1]

    # BN(prev) + ReLU prologue.  The spatial padding border holds raw zeros,
    # which must map to 0 (not relu(shift)), so mask it explicitly.
    row_idx = r0 + lax.broadcasted_iota(jnp.int32, (rows_in, wp, 1), 0)
    col_idx = lax.broadcasted_iota(jnp.int32, (rows_in, wp, 1), 1)
    in_bounds = ((row_idx >= pad) & (row_idx < pad + h_valid)
                 & (col_idx >= pad) & (col_idx < pad + w_valid))
    act = jnp.maximum(xt * scale_ref[0] + shift_ref[0], 0.0)
    act = jnp.where(in_bounds, act, 0.0)

    # Wide-K accumulation: the 3 kw taps are packed side-by-side into one
    # (rows, 3*Cin) panel so each kh is a single K=3*Cin MXU matmul (3 wide
    # matmuls per tile instead of 9 narrow K=Cin ones).  A single chained f32
    # accumulator lets Mosaic use the MXU accumulate path.
    r_lim = (th - 1) * stride + 1
    c_lim = (wout - 1) * stride + 1
    acc = jnp.zeros((th * wout, cout), jnp.float32)
    for kh in range(3):
        r = kh * dilation
        for kw in range(3):
            c = kw * dilation
            tap = act[r:r + r_lim:stride, c:c + c_lim:stride, :]   # (th,wout,Cin)
            panel_ref[:, kw * cin:(kw + 1) * cin] = tap.reshape(th * wout, cin)
        acc = acc + jnp.dot(panel_ref[...], w_ref[kh],
                            preferred_element_type=jnp.float32)

    o_ref[...] = acc.reshape(th, wout, cout).astype(o_ref.dtype)
    sum_ref[...] = jnp.sum(acc, axis=0, keepdims=True)
    ssq_ref[...] = jnp.sum(acc * acc, axis=0, keepdims=True)


def _bn_add_relu_kernel(x_ref, id_ref, scale_ref, shift_ref, o_ref):
    """Final epilogue: BN3 apply + residual add + ReLU, tiled over rows."""
    o_ref[...] = jnp.maximum(
        x_ref[...] * scale_ref[...] + shift_ref[...] + id_ref[...], 0.0)


# ---------------------------------------------------------------------------
# pallas_call wrappers
# ---------------------------------------------------------------------------
def conv1x1_fused(x_flat, w, scale_prev, shift_prev, *, apply_prologue,
                  block_rows=None):
    """1x1 conv over the flattened (M, Cin) activation with fused prologue
    BN+ReLU and fused per-block BN statistics of the output."""
    M, Cin = x_flat.shape
    Cout = w.shape[1]
    tm = min(block_rows if block_rows is not None else 512, M)
    gm = pl.cdiv(M, tm)

    kern = functools.partial(_mm_stats_kernel, apply_prologue=apply_prologue,
                             m_total=M, tm=tm)
    out, bsum, bssq = pl.pallas_call(
        kern,
        out_shape=(jax.ShapeDtypeStruct((M, Cout), jnp.float32),
                   jax.ShapeDtypeStruct((gm, 1, Cout), jnp.float32),
                   jax.ShapeDtypeStruct((gm, 1, Cout), jnp.float32)),
        grid=(gm,),
        in_specs=[pl.BlockSpec((tm, Cin), lambda i: (i, 0)),
                  pl.BlockSpec((Cin, Cout), lambda i: (0, 0)),
                  pl.BlockSpec((1, Cin), lambda i: (0, 0)),
                  pl.BlockSpec((1, Cin), lambda i: (0, 0))],
        out_specs=(pl.BlockSpec((tm, Cout), lambda i: (i, 0)),
                   pl.BlockSpec((None, 1, Cout), lambda i: (i, 0, 0)),
                   pl.BlockSpec((None, 1, Cout), lambda i: (i, 0, 0))),
        compiler_params=pltpu.CompilerParams(
            dimension_semantics=("parallel",),
            vmem_limit_bytes=_VMEM_LIMIT),
    )(x_flat, w, scale_prev, shift_prev)
    return out, bsum, bssq


def _pick_row_tile(hout, wout, override=None, max_rows=1024):
    if override is not None and 0 < override <= hout and hout % override == 0:
        return override
    best = 1
    for cand in range(1, hout + 1):
        if hout % cand == 0 and cand * wout <= max_rows:
            best = cand
    return best


def conv3x3_fused(x_nhwc, w_hwio, scale_prev, shift_prev, *,
                  stride=1, dilation=1, block_rows=None):
    """3x3 conv (padding=dilation), BN(prev)+ReLU fused into the prologue,
    per-block BN statistics of the output fused into the epilogue."""
    N, H, W, Cin = x_nhwc.shape
    Cout = w_hwio.shape[-1]
    pad = dilation
    # TODO(synk): the 1-pixel halo could be handled in-kernel (masked edge
    # taps) to avoid this extra HBM round trip of the padded copy; kept here
    # for simplicity — it is the smallest activation in the block.
    xp = jnp.pad(x_nhwc, ((0, 0), (pad, pad), (pad, pad), (0, 0)))
    Hp, Wp = H + 2 * pad, W + 2 * pad
    eff_k = 2 * dilation + 1
    hout = (Hp - eff_k) // stride + 1
    wout = (Wp - eff_k) // stride + 1

    th = _pick_row_tile(hout, wout, block_rows)
    n_ht = hout // th
    rows_in = (th - 1) * stride + 2 * dilation + 1

    # fold kw into K: (3, 3, Cin, Cout) -> (kh, kw*Cin, Cout)
    w_folded = w_hwio.reshape(3, 3 * Cin, Cout)

    kern = functools.partial(
        _conv3x3_fused_kernel, stride=stride, dilation=dilation, th=th,
        wout=wout, pad=pad, h_valid=H, w_valid=W, rows_in=rows_in)

    out, bsum, bssq = pl.pallas_call(
        kern,
        out_shape=(jax.ShapeDtypeStruct((N, hout, wout, Cout), jnp.float32),
                   jax.ShapeDtypeStruct((N, n_ht, 1, Cout), jnp.float32),
                   jax.ShapeDtypeStruct((N, n_ht, 1, Cout), jnp.float32)),
        grid=(N, n_ht),
        in_specs=[
            # whole padded image resident across the row-tile axis
            # (same block index for all j => DMA'd once per batch element)
            pl.BlockSpec((None, Hp, Wp, Cin), lambda n, j: (n, 0, 0, 0)),
            pl.BlockSpec((3, 3 * Cin, Cout), lambda n, j: (0, 0, 0)),
            pl.BlockSpec((1, Cin), lambda n, j: (0, 0)),
            pl.BlockSpec((1, Cin), lambda n, j: (0, 0)),
        ],
        out_specs=(
            pl.BlockSpec((None, th, wout, Cout), lambda n, j: (n, j, 0, 0)),
            pl.BlockSpec((None, None, 1, Cout), lambda n, j: (n, j, 0, 0)),
            pl.BlockSpec((None, None, 1, Cout), lambda n, j: (n, j, 0, 0)),
        ),
        scratch_shapes=[pltpu.VMEM((th * wout, 3 * Cin), jnp.float32)],
        compiler_params=pltpu.CompilerParams(
            dimension_semantics=("parallel", "arbitrary"),
            vmem_limit_bytes=_VMEM_LIMIT),
    )(xp, w_folded, scale_prev, shift_prev)
    return out, bsum, bssq, hout, wout


def bn_add_relu(x_flat, id_flat, scale, shift, *, block_rows=None):
    M, C = x_flat.shape
    tm = min(block_rows if block_rows is not None else 512, M)
    gm = pl.cdiv(M, tm)
    return pl.pallas_call(
        _bn_add_relu_kernel,
        out_shape=jax.ShapeDtypeStruct((M, C), jnp.float32),
        grid=(gm,),
        in_specs=[pl.BlockSpec((tm, C), lambda i: (i, 0)),
                  pl.BlockSpec((tm, C), lambda i: (i, 0)),
                  pl.BlockSpec((1, C), lambda i: (0, 0)),
                  pl.BlockSpec((1, C), lambda i: (0, 0))],
        out_specs=pl.BlockSpec((tm, C), lambda i: (i, 0)),
        compiler_params=pltpu.CompilerParams(
            dimension_semantics=("parallel",),
            vmem_limit_bytes=_VMEM_LIMIT),
    )(x_flat, id_flat, scale, shift)


def _finalize_bn(bsum, bssq, count, gamma, beta):
    """Tiny (C,)-sized reduction of the per-block partial sums -> BN scale/shift."""
    c = bsum.shape[-1]
    s = jnp.sum(bsum.reshape(-1, c), axis=0)
    sq = jnp.sum(bssq.reshape(-1, c), axis=0)
    mean = s / count
    var = jnp.maximum(sq / count - mean * mean, 0.0)   # biased, training-mode BN
    scale = gamma / jnp.sqrt(var + EPS)
    shift = beta - mean * scale
    return scale.reshape(1, c), shift.reshape(1, c)


# ---------------------------------------------------------------------------
# Bottleneck forward
# ---------------------------------------------------------------------------
def bottleneck_forward(x_nchw, p, *, stride=1, dilation=1,
                       mm_block_rows=None, conv2_block_rows=None):
    # TODO(synk): downsample=None in this configuration (in_channels ==
    # 4*out_channels, stride == 1); an arbitrary `downsample` submodule is not
    # translated.
    x = jnp.transpose(x_nchw, (0, 2, 3, 1))           # NCHW -> NHWC
    N, H, W, Cin = x.shape
    identity_flat = x.reshape(N * H * W, Cin)

    ones_in = jnp.ones((1, Cin), jnp.float32)
    zeros_in = jnp.zeros((1, Cin), jnp.float32)

    # stage 1: conv1 (1x1) + BN1 statistics  (conv bias cancelled by train-BN)
    c1 = p["w1"].shape[1]
    y1, s1, q1 = conv1x1_fused(x.reshape(N * H * W, Cin), p["w1"],
                               ones_in, zeros_in, apply_prologue=False,
                               block_rows=mm_block_rows)
    scale1, shift1 = _finalize_bn(s1, q1, N * H * W, p["g1"], p["be1"])

    # stage 2: BN1+ReLU (fused prologue) -> conv2 (3x3) + BN2 statistics
    y2, s2, q2, hout, wout = conv3x3_fused(
        y1.reshape(N, H, W, c1), p["w2"], scale1, shift1,
        stride=stride, dilation=dilation, block_rows=conv2_block_rows)
    c2 = p["w2"].shape[-1]
    scale2, shift2 = _finalize_bn(s2, q2, N * hout * wout, p["g2"], p["be2"])

    # stage 3: BN2+ReLU (fused prologue) -> conv3 (1x1) + BN3 statistics
    y3, s3, q3 = conv1x1_fused(y2.reshape(N * hout * wout, c2), p["w3"],
                               scale2, shift2, apply_prologue=True,
                               block_rows=mm_block_rows)
    c3 = p["w3"].shape[1]
    scale3, shift3 = _finalize_bn(s3, q3, N * hout * wout, p["g3"], p["be3"])

    # epilogue: BN3 apply + residual add + ReLU
    out = bn_add_relu(y3, identity_flat, scale3, shift3,
                      block_rows=mm_block_rows)
    out = out.reshape(N, hout, wout, c3)
    return jnp.transpose(out, (0, 3, 1, 2))           # NHWC -> NCHW


# ---------------------------------------------------------------------------
# Pure-JAX reference (correctness check only; includes the conv biases)
# ---------------------------------------------------------------------------
def _ref_forward(x_nchw, p, *, stride=1, dilation=1):
    x = jnp.transpose(x_nchw, (0, 2, 3, 1))

    def conv(x, w_hwio, b, stride=1, dilation=1, pad=0):
        y = lax.conv_general_dilated(
            x, w_hwio, window_strides=(stride, stride),
            padding=((pad, pad), (pad, pad)),
            rhs_dilation=(dilation, dilation),
            dimension_numbers=("NHWC", "HWIO", "NHWC"))
        return y + b

    def bn(x, g, b):
        m = jnp.mean(x, axis=(0, 1, 2))
        v = jnp.mean((x - m) ** 2, axis=(0, 1, 2))
        return (x - m) / jnp.sqrt(v + EPS) * g + b

    identity = x
    y = jax.nn.relu(bn(conv(x, p["w1"][None, None], p["b1"]), p["g1"], p["be1"]))
    y = jax.nn.relu(bn(conv(y, p["w2"], p["b2"], stride=stride,
                            dilation=dilation, pad=dilation), p["g2"], p["be2"]))
    y = bn(conv(y, p["w3"][None, None], p["b3"]), p["g3"], p["be3"])
    y = jax.nn.relu(y + identity)
    return jnp.transpose(y, (0, 3, 1, 2))


# ---------------------------------------------------------------------------
def init_params(key, in_channels, out_channels):
    ks = jax.random.split(key, 6)
    return {
        # conv1: 1x1, in -> out          (stored (Cin, Cout))
        "w1": 0.1 * jax.random.normal(ks[0], (in_channels, out_channels), jnp.float32),
        "b1": 0.05 * jax.random.normal(ks[1], (out_channels,), jnp.float32),
        "g1": jnp.ones((out_channels,), jnp.float32),
        "be1": jnp.zeros((out_channels,), jnp.float32),
        # conv2: 3x3, out -> out         (stored HWIO: (3,3,Cin,Cout))
        "w2": 0.1 * jax.random.normal(ks[2], (3, 3, out_channels, out_channels), jnp.float32),
        "b2": 0.05 * jax.random.normal(ks[3], (out_channels,), jnp.float32),
        "g2": jnp.ones((out_channels,), jnp.float32),
        "be2": jnp.zeros((out_channels,), jnp.float32),
        # conv3: 1x1, out -> 4*out       (stored (Cin, Cout))
        "w3": 0.1 * jax.random.normal(ks[4], (out_channels, out_channels * 4), jnp.float32),
        "b3": 0.05 * jax.random.normal(ks[5], (out_channels * 4,), jnp.float32),
        "g3": jnp.ones((out_channels * 4,), jnp.float32),
        "be3": jnp.zeros((out_channels * 4,), jnp.float32),
    }


if __name__ == "__main__":
    key = jax.random.PRNGKey(0)
    k_x, k_p = jax.random.split(key)

    # residual connection requires in_channels == out_channels * 4 (downsample=None)
    in_channels, out_channels = 16, 4
    N, H, W = 2, 16, 16
    x = jax.random.normal(k_x, (N, in_channels, H, W), jnp.float32)  # NCHW
    params = init_params(k_p, in_channels, out_channels)

    # Config 1: default tiling, stride=1, dilation=1.
    out = jax.block_until_ready(bottleneck_forward(x, params, stride=1, dilation=1))
    ref = jax.block_until_ready(_ref_forward(x, params, stride=1, dilation=1))
    assert out.shape == (N, out_channels * 4, H, W), out.shape
    assert jnp.allclose(out, ref, rtol=1e-3, atol=1e-3), \
        float(jnp.max(jnp.abs(out - ref)))

    # Config 2: exercises the ragged-tail masking (96-row tiles over M=512),
    # the multi-step conv2 row grid, and the dilation path.
    out2 = jax.block_until_ready(
        bottleneck_forward(x, params, stride=1, dilation=2,
                           mm_block_rows=96, conv2_block_rows=4))
    ref2 = jax.block_until_ready(_ref_forward(x, params, stride=1, dilation=2))
    assert out2.shape == (N, out_channels * 4, H, W), out2.shape
    assert jnp.allclose(out2, ref2, rtol=1e-3, atol=1e-3), \
        float(jnp.max(jnp.abs(out2 - ref2)))

    print("KERNEL_OK")
</pallas_src>

<mosaic_0001>
module attributes {stable_mosaic.version = 11 : i64} {
  func.func @_mm_stats_kernel(%arg0: i32, %arg1: memref<512x16xf32, #tpu.memory_space<vmem>>, %arg2: memref<16x4xf32, #tpu.memory_space<vmem>>, %arg3: memref<1x16xf32, #tpu.memory_space<vmem>>, %arg4: memref<1x16xf32, #tpu.memory_space<vmem>>, %arg5: memref<512x4xf32, #tpu.memory_space<vmem>>, %arg6: memref<1x1x4xf32, #tpu.memory_space<vmem>>, %arg7: memref<1x1x4xf32, #tpu.memory_space<vmem>>) attributes {dimension_semantics = [#tpu.dimension_semantics<parallel>], iteration_bounds = array<i64: 1>, scalar_prefetch = 0 : i64, scratch_operands = 0 : i64, tpu.core_type = #tpu.core_type<tc>, window_params = [{transform_indices = @transform_0, window_bounds = array<i64: 512, 16>}, {pipeline_mode = #tpu.pipeline_mode<synchronous>, transform_indices = @transform_1, window_bounds = array<i64: 16, 4>}, {pipeline_mode = #tpu.pipeline_mode<synchronous>, transform_indices = @transform_2, window_bounds = array<i64: 1, 16>}, {pipeline_mode = #tpu.pipeline_mode<synchronous>, transform_indices = @transform_3, window_bounds = array<i64: 1, 16>}, {transform_indices = @transform_4, window_bounds = array<i64: 512, 4>}, {transform_indices = @transform_5, window_bounds = array<i64: 1, 1, 4>}, {transform_indices = @transform_6, window_bounds = array<i64: 1, 1, 4>}]} {
    %c0 = arith.constant 0 : index
    %c0_0 = arith.constant 0 : index
    %0 = vector.load %arg1[%c0, %c0_0] : memref<512x16xf32, #tpu.memory_space<vmem>>, vector<512x16xf32>
    %c0_1 = arith.constant 0 : index
    %c0_2 = arith.constant 0 : index
    %1 = vector.load %arg2[%c0_1, %c0_2] : memref<16x4xf32, #tpu.memory_space<vmem>>, vector<16x4xf32>
    %cst = arith.constant dense<0.000000e+00> : vector<512x4xf32>
    %2 = tpu.matmul %0, %1, %cst {dimension_numbers = #tpu.dot_dimension_numbers<[1], [0], [0], [1], [0, 0, 1, 1], [], []>} : vector<512x16xf32>, vector<16x4xf32>, vector<512x4xf32> -> vector<512x4xf32>
    %c0_3 = arith.constant 0 : index
    %c0_4 = arith.constant 0 : index
    %3 = vector.load %arg5[%c0_3, %c0_4] : memref<512x4xf32, #tpu.memory_space<vmem>>, vector<512x4xf32>
    tpu.vector_store %arg5[%c0_3, %c0_4], %2 {strides = array<i32>} : memref<512x4xf32, #tpu.memory_space<vmem>>, vector<512x4xf32>,
    %cst_5 = arith.constant dense<0.000000e+00> : vector<4xf32>
    %4 = vector.multi_reduction <add>, %2, %cst_5 [0] : vector<512x4xf32> to vector<4xf32>
    %5 = vector.shape_cast %4 : vector<4xf32> to vector<1x4xf32>
    %c0_6 = arith.constant 0 : index
    %c0_7 = arith.constant 0 : index
    %c0_8 = arith.constant 0 : index
    %6 = vector.load %arg6[%c0_6, %c0_7, %c0_8] : memref<1x1x4xf32, #tpu.memory_space<vmem>>, vector<1x1x4xf32>
    %7 = vector.shape_cast %6 : vector<1x1x4xf32> to vector<1x4xf32>
    %8 = vector.shape_cast %5 : vector<1x4xf32> to vector<1x1x4xf32>
    tpu.vector_store %arg6[%c0_6, %c0_7, %c0_8], %8 {strides = array<i32>} : memref<1x1x4xf32, #tpu.memory_space<vmem>>, vector<1x1x4xf32>,
    %9 = arith.mulf %2, %2 : vector<512x4xf32>
    %cst_9 = arith.constant dense<0.000000e+00> : vector<4xf32>
    %10 = vector.multi_reduction <add>, %9, %cst_9 [0] : vector<512x4xf32> to vector<4xf32>
    %11 = vector.shape_cast %10 : vector<4xf32> to vector<1x4xf32>
    %c0_10 = arith.constant 0 : index
    %c0_11 = arith.constant 0 : index
    %c0_12 = arith.constant 0 : index
    %12 = vector.load %arg7[%c0_10, %c0_11, %c0_12] : memref<1x1x4xf32, #tpu.memory_space<vmem>>, vector<1x1x4xf32>
    %13 = vector.shape_cast %12 : vector<1x1x4xf32> to vector<1x4xf32>
    %14 = vector.shape_cast %11 : vector<1x4xf32> to vector<1x1x4xf32>
    tpu.vector_store %arg7[%c0_10, %c0_11, %c0_12], %14 {strides = array<i32>} : memref<1x1x4xf32, #tpu.memory_space<vmem>>, vector<1x1x4xf32>,
    return
  }
  func.func @transform_0(%arg0: i32) -> (i32, i32) {
    %c0_i32 = arith.constant 0 : i32
    %c0_i32_0 = arith.constant 0 : i32
    return %arg0, %c0_i32 : i32, i32
  }
  func.func @transform_1(%arg0: i32) -> (i32, i32) {
    %c0_i32 = arith.constant 0 : i32
    %c0_i32_0 = arith.constant 0 : i32
    %c0_i32_1 = arith.constant 0 : i32
    return %c0_i32, %c0_i32_0 : i32, i32
  }
  func.func @transform_2(%arg0: i32) -> (i32, i32) {
    %c0_i32 = arith.constant 0 : i32
    %c0_i32_0 = arith.constant 0 : i32
    %c0_i32_1 = arith.constant 0 : i32
    return %c0_i32, %c0_i32_0 : i32, i32
  }
  func.func @transform_3(%arg0: i32) -> (i32, i32) {
    %c0_i32 = arith.constant 0 : i32
    %c0_i32_0 = arith.constant 0 : i32
    %c0_i32_1 = arith.constant 0 : i32
    return %c0_i32, %c0_i32_0 : i32, i32
  }
  func.func @transform_4(%arg0: i32) -> (i32, i32) {
    %c0_i32 = arith.constant 0 : i32
    %c0_i32_0 = arith.constant 0 : i32
    return %arg0, %c0_i32 : i32, i32
  }
  func.func @transform_5(%arg0: i32) -> (i32, i32, i32) {
    %c0_i32 = arith.constant 0 : i32
    %c0_i32_0 = arith.constant 0 : i32
    %c0_i32_1 = arith.constant 0 : i32
    return %arg0, %c0_i32, %c0_i32_0 : i32, i32, i32
  }
  func.func @transform_6(%arg0: i32) -> (i32, i32, i32) {
    %c0_i32 = arith.constant 0 : i32
    %c0_i32_0 = arith.constant 0 : i32
    %c0_i32_1 = arith.constant 0 : i32
    return %arg0, %c0_i32, %c0_i32_0 : i32, i32, i32
  }
}

</mosaic_0001>

<llo_original>
// kernel: tpu_custom_call.1
$region0: #{tpu_custom_call.1}
  #allocation0 [shape = 'u32[]', space=smem, size = 0x4, offset = 0x4, fixed_abs, tag = 'smem constant byte address 0x4 - core index']
  #allocation1 [shape = 'u32[72,128]{1,0:T(1,128)}', space=vmem, size = 0x9000, scoped, tag = 'internal scratch']
  %s0 = inlined_call_operand.vmem [shape: f32[512,16], index: 0, kind: input, shape index: {}]
  %s1 = inlined_call_operand.vmem [shape: f32[16,4], index: 1, kind: input, shape index: {}]
  %s2 = inlined_call_operand.vmem [shape: f32[1,16], index: 2, kind: input, shape index: {}]
  %s3 = inlined_call_operand.vmem [shape: f32[1,16], index: 3, kind: input, shape index: {}]
  %s4 = inlined_call_operand.vmem [shape: f32[512,4], index: 4, kind: output, shape index: {0}]
  %s5 = inlined_call_operand.hbm [shape: f32[1,1,4], index: 5, kind: output, shape index: {1}]
  %s6 = inlined_call_operand.hbm [shape: f32[1,1,4], index: 6, kind: output, shape index: {2}]
  %7 = xla_tuple %s4, %s5, %s6
  %s8 = sld [smem:[#allocation0]]
  $region42: #{tpu_custom_call.1} parent=0
    _
  %s10 = ssub.s32 1, %s8
  %s11 = scalar_select 0, %s10, %s8
  $region1: #{tpu_custom_call.1} parent=0
    #allocation2 [shape = 'u8[512]{0}', space=vmem, size = 0x400, scoped, tag = 'output window, operand 1, single buffered']
    #allocation3 [shape = 's32[1]{0}', space=sflag, size = 0x4, scoped, tag = 'scoped memory for tpu_custom_call.1']
    #allocation4 [shape = 'u8[512]{0}', space=vmem, size = 0x400, scoped, tag = 'output window, operand 2, single buffered']
    #allocation5 [shape = 's32[1]{0}', space=sflag, size = 0x4, scoped, tag = 'scoped memory for tpu_custom_call.1']
    %12 = vsyncpa [#allocation3], 0
    %13 = vsyncpa [#allocation5], 0
    // Predicated region
    $region2: #{tpu_custom_call.1} parent=1 // pred_check
      _
    $region3: #{tpu_custom_call.1} parent=1 // pred_check_branch
      %15 = sbr.rel (0) target = $region5
    $region4: #{tpu_custom_call.1} parent=1 // pred_region
      _
    $region5: #{tpu_custom_call.1} parent=1 // pred_fallthru
      _
    // Predicated region
    $region6: #{tpu_custom_call.1} parent=1 // pred_check
      _
    $region7: #{tpu_custom_call.1} parent=1 // pred_check_branch
      %17 = sbr.rel (0) target = $region9
    $region8: #{tpu_custom_call.1} parent=1 // pred_region
      _
    $region9: #{tpu_custom_call.1} parent=1 // pred_fallthru
      _
    // Predicated region
    $region10: #{tpu_custom_call.1} parent=1 // pred_check
      _
    $region11: #{tpu_custom_call.1} parent=1 // pred_check_branch
      %19 = sbr.rel (0) target = $region13
    $region12: #{tpu_custom_call.1} parent=1 // pred_region
      _
    $region13: #{tpu_custom_call.1} parent=1 // pred_fallthru
      _
    // Predicated region
    $region14: #{tpu_custom_call.1} parent=1 // pred_check
      _
    $region15: #{tpu_custom_call.1} parent=1 // pred_check_branch
      %21 = sbr.rel (0) target = $region17
    $region16: #{tpu_custom_call.1} parent=1 // pred_region
      _
    $region17: #{tpu_custom_call.1} parent=1 // pred_fallthru
      _
    %v22 = vld [vmem:[%s0] sm:$0xff]
    %v23 = vld [vmem:[%s0 + $0x8] sm:$0xff]
    %v24 = vld [vmem:[%s0 + $0x10] sm:$0xff]
    %v25 = vld [vmem:[%s0 + $0x18] sm:$0xff]
    %v26 = vld [vmem:[%s0 + $0x20] sm:$0xff]
    %v27 = vld [vmem:[%s0 + $0x28] sm:$0xff]
    %v28 = vld [vmem:[%s0 + $0x30] sm:$0xff]
    %v29 = vld [vmem:[%s0 + $0x38] sm:$0xff]
    %v30 = vld [vmem:[%s0 + $0x40] sm:$0xff]
    %v31 = vld [vmem:[%s0 + $0x48] sm:$0xff]
    %v32 = vld [vmem:[%s0 + $0x50] sm:$0xff]
    %v33 = vld [vmem:[%s0 + $0x58] sm:$0xff]
    %v34 = vld [vmem:[%s0 + $0x60] sm:$0xff]
    %v35 = vld [vmem:[%s0 + $0x68] sm:$0xff]
    %v36 = vld [vmem:[%s0 + $0x70] sm:$0xff]
    %v37 = vld [vmem:[%s0 + $0x78] sm:$0xff]
    %v38 = vld [vmem:[%s0 + $0x80] sm:$0xff]
    %v39 = vld [vmem:[%s0 + $0x88] sm:$0xff]
    %v40 = vld [vmem:[%s0 + $0x90] sm:$0xff]
    %v41 = vld [vmem:[%s0 + $0x98] sm:$0xff]
    %v42 = vld [vmem:[%s0 + $0xa0] sm:$0xff]
    %v43 = vld [vmem:[%s0 + $0xa8] sm:$0xff]
    %v44 = vld [vmem:[%s0 + $0xb0] sm:$0xff]
    %v45 = vld [vmem:[%s0 + $0xb8] sm:$0xff]
    %v46 = vld [vmem:[%s0 + $0xc0] sm:$0xff]
    %v47 = vld [vmem:[%s0 + $0xc8] sm:$0xff]
    %v48 = vld [vmem:[%s0 + $0xd0] sm:$0xff]
    %v49 = vld [vmem:[%s0 + $0xd8] sm:$0xff]
    %v50 = vld [vmem:[%s0 + $0xe0] sm:$0xff]
    %v51 = vld [vmem:[%s0 + $0xe8] sm:$0xff]
    %v52 = vld [vmem:[%s0 + $0xf0] sm:$0xff]
    %v53 = vld [vmem:[%s0 + $0xf8] sm:$0xff]
    %v54 = vld [vmem:[%s0 + $0x100] sm:$0xff]
    %v55 = vld [vmem:[%s0 + $0x108] sm:$0xff]
    %v56 = vld [vmem:[%s0 + $0x110] sm:$0xff]
    %v57 = vld [vmem:[%s0 + $0x118] sm:$0xff]
    %v58 = vld [vmem:[%s0 + $0x120] sm:$0xff]
    %v59 = vld [vmem:[%s0 + $0x128] sm:$0xff]
    %v60 = vld [vmem:[%s0 + $0x130] sm:$0xff]
    %v61 = vld [vmem:[%s0 + $0x138] sm:$0xff]
    %v62 = vld [vmem:[%s0 + $0x140] sm:$0xff]
    %v63 = vld [vmem:[%s0 + $0x148] sm:$0xff]
    %v64 = vld [vmem:[%s0 + $0x150] sm:$0xff]
    %v65 = vld [vmem:[%s0 + $0x158] sm:$0xff]
    %v66 = vld [vmem:[%s0 + $0x160] sm:$0xff]
    %v67 = vld [vmem:[%s0 + $0x168] sm:$0xff]
    %v68 = vld [vmem:[%s0 + $0x170] sm:$0xff]
    %v69 = vld [vmem:[%s0 + $0x178] sm:$0xff]
    %v70 = vld [vmem:[%s0 + $0x180] sm:$0xff]
    %v71 = vld [vmem:[%s0 + $0x188] sm:$0xff]
    %v72 = vld [vmem:[%s0 + $0x190] sm:$0xff]
    %v73 = vld [vmem:[%s0 + $0x198] sm:$0xff]
    %v74 = vld [vmem:[%s0 + $0x1a0] sm:$0xff]
    %v75 = vld [vmem:[%s0 + $0x1a8] sm:$0xff]
    %v76 = vld [vmem:[%s0 + $0x1b0] sm:$0xff]
    %v77 = vld [vmem:[%s0 + $0x1b8] sm:$0xff]
    %v78 = vld [vmem:[%s0 + $0x1c0] sm:$0xff]
    %v79 = vld [vmem:[%s0 + $0x1c8] sm:$0xff]
    %v80 = vld [vmem:[%s0 + $0x1d0] sm:$0xff]
    %v81 = vld [vmem:[%s0 + $0x1d8] sm:$0xff]
    %v82 = vld [vmem:[%s0 + $0x1e0] sm:$0xff]
    %v83 = vld [vmem:[%s0 + $0x1e8] sm:$0xff]
    %v84 = vld [vmem:[%s0 + $0x1f0] sm:$0xff]
    %v85 = vld [vmem:[%s0 + $0x1f8] sm:$0xff]
    %v86 = vld [vmem:[%s1] sm:$0xff]
    %v87 = vld [vmem:[%s1 + $0x8] sm:$0xff]
    %vm88 = vcmask 130048
    %v90 = vsel %vm88, %v22, 0
    %v93 = vsel %vm88, %v23, 0
    %v96 = vsel %vm88, %v24, 0
    %v99 = vsel %vm88, %v25, 0
    %v102 = vsel %vm88, %v26, 0
    %v105 = vsel %vm88, %v27, 0
    %v108 = vsel %vm88, %v28, 0
    %v111 = vsel %vm88, %v29, 0
    %v114 = vsel %vm88, %v30, 0
    %v117 = vsel %vm88, %v31, 0
    %v120 = vsel %vm88, %v32, 0
    %v123 = vsel %vm88, %v33, 0
    %v126 = vsel %vm88, %v34, 0
    %v129 = vsel %vm88, %v35, 0
    %v132 = vsel %vm88, %v36, 0
    %v135 = vsel %vm88, %v37, 0
    %v138 = vsel %vm88, %v38, 0
    %v141 = vsel %vm88, %v39, 0
    %v144 = vsel %vm88, %v40, 0
    %v147 = vsel %vm88, %v41, 0
    %v150 = vsel %vm88, %v42, 0
    %v153 = vsel %vm88, %v43, 0
    %v156 = vsel %vm88, %v44, 0
    %v159 = vsel %vm88, %v45, 0
    %v162 = vsel %vm88, %v46, 0
    %v165 = vsel %vm88, %v47, 0
    %v168 = vsel %vm88, %v48, 0
    %v171 = vsel %vm88, %v49, 0
    %v174 = vsel %vm88, %v50, 0
    %v177 = vsel %vm88, %v51, 0
    %v180 = vsel %vm88, %v52, 0
    %v183 = vsel %vm88, %v53, 0
    %v186 = vsel %vm88, %v54, 0
    %v189 = vsel %vm88, %v55, 0
    %v192 = vsel %vm88, %v56, 0
    %v195 = vsel %vm88, %v57, 0
    %v198 = vsel %vm88, %v58, 0
    %v201 = vsel %vm88, %v59, 0
    %v204 = vsel %vm88, %v60, 0
    %v207 = vsel %vm88, %v61, 0
    %v210 = vsel %vm88, %v62, 0
    %v213 = vsel %vm88, %v63, 0
    %v216 = vsel %vm88, %v64, 0
    %v219 = vsel %vm88, %v65, 0
    %v222 = vsel %vm88, %v66, 0
    %v225 = vsel %vm88, %v67, 0
    %v228 = vsel %vm88, %v68, 0
    %v231 = vsel %vm88, %v69, 0
    %v234 = vsel %vm88, %v70, 0
    %v237 = vsel %vm88, %v71, 0
    %v240 = vsel %vm88, %v72, 0
    %v243 = vsel %vm88, %v73, 0
    %v246 = vsel %vm88, %v74, 0
    %v249 = vsel %vm88, %v75, 0
    %v252 = vsel %vm88, %v76, 0
    %v255 = vsel %vm88, %v77, 0
    %v258 = vsel %vm88, %v78, 0
    %v261 = vsel %vm88, %v79, 0
    %v264 = vsel %vm88, %v80, 0
    %v267 = vsel %vm88, %v81, 0
    %v270 = vsel %vm88, %v82, 0
    %v273 = vsel %vm88, %v83, 0
    %v276 = vsel %vm88, %v84, 0
    %v279 = vsel %vm88, %v85, 0
    %281 = vmatpush.msra.mxu0 0.0
    %282 = vmatpush.msra.mxu0 0.0
    %283 = vmatpush.msra.mxu0 0.0
    %284 = vmatpush.msra.mxu0 0.0
    %285 = vmatpush.msra.mxu0 0.0
    %286 = vmatpush.msra.mxu0 0.0
    %287 = vmatpush.msra.mxu0 0.0
    %288 = vmatpush.msra.mxu0 0.0
    %289 = vmatpush.msra.mxu0 0.0
    %290 = vmatpush.msra.mxu0 0.0
    %291 = vmatpush.msra.mxu0 0.0
    %292 = vmatpush.msra.mxu0 0.0
    %293 = vmatpush.msra.mxu0 0.0
    %294 = vmatpush.msra.mxu0 0.0
    %295 = vmatpush.msra.mxu0 %v87
    %296 = vmatpush.msra.mxu0 %v86
    %297 = vmatmul.f32.gmra.mxu0 %v90
    %v298 = vpop.f32.mrf.mxu0
    %v299 = vadd.f32 0.0, %v298
    %300 = vmatmul.f32.gmra.mxu0 %v93
    %v301 = vpop.f32.mrf.mxu0
    %v302 = vadd.f32 0.0, %v301
    %303 = vmatmul.f32.gmra.mxu0 %v96
    %v304 = vpop.f32.mrf.mxu0
    %v305 = vadd.f32 0.0, %v304
    %306 = vmatmul.f32.gmra.mxu0 %v99
    %v307 = vpop.f32.mrf.mxu0
    %v308 = vadd.f32 0.0, %v307
    %309 = vmatmul.f32.gmra.mxu0 %v102
    %v310 = vpop.f32.mrf.mxu0
    %v311 = vadd.f32 0.0, %v310
    %312 = vmatmul.f32.gmra.mxu0 %v105
    %v313 = vpop.f32.mrf.mxu0
    %v314 = vadd.f32 0.0, %v313
    %315 = vmatmul.f32.gmra.mxu0 %v108
    %v316 = vpop.f32.mrf.mxu0
    %v317 = vadd.f32 0.0, %v316
    %318 = vmatmul.f32.gmra.mxu0 %v111
    %v319 = vpop.f32.mrf.mxu0
    %v320 = vadd.f32 0.0, %v319
    %321 = vmatmul.f32.gmra.mxu0 %v114
    %v322 = vpop.f32.mrf.mxu0
    %v323 = vadd.f32 0.0, %v322
    %324 = vmatmul.f32.gmra.mxu0 %v117
    %v325 = vpop.f32.mrf.mxu0
    %v326 = vadd.f32 0.0, %v325
    %327 = vmatmul.f32.gmra.mxu0 %v120
    %v328 = vpop.f32.mrf.mxu0
    %v329 = vadd.f32 0.0, %v328
    %330 = vmatmul.f32.gmra.mxu0 %v123
    %v331 = vpop.f32.mrf.mxu0
    %v332 = vadd.f32 0.0, %v331
    %333 = vmatmul.f32.gmra.mxu0 %v126
    %v334 = vpop.f32.mrf.mxu0
    %v335 = vadd.f32 0.0, %v334
    %336 = vmatmul.f32.gmra.mxu0 %v129
    %v337 = vpop.f32.mrf.mxu0
    %v338 = vadd.f32 0.0, %v337
    %339 = vmatmul.f32.gmra.mxu0 %v132
    %v340 = vpop.f32.mrf.mxu0
    %v341 = vadd.f32 0.0, %v340
    %342 = vmatmul.f32.gmra.mxu0 %v135
    %v343 = vpop.f32.mrf.mxu0
    %v344 = vadd.f32 0.0, %v343
    %345 = vmatmul.f32.gmra.mxu0 %v138
    %v346 = vpop.f32.mrf.mxu0
    %v347 = vadd.f32 0.0, %v346
    %348 = vmatmul.f32.gmra.mxu0 %v141
    %v349 = vpop.f32.mrf.mxu0
    %v350 = vadd.f32 0.0, %v349
    %351 = vmatmul.f32.gmra.mxu0 %v144
    %v352 = vpop.f32.mrf.mxu0
    %v353 = vadd.f32 0.0, %v352
    %354 = vmatmul.f32.gmra.mxu0 %v147
    %v355 = vpop.f32.mrf.mxu0
    %v356 = vadd.f32 0.0, %v355
    %357 = vmatmul.f32.gmra.mxu0 %v150
    %v358 = vpop.f32.mrf.mxu0
    %v359 = vadd.f32 0.0, %v358
    %360 = vmatmul.f32.gmra.mxu0 %v153
    %v361 = vpop.f32.mrf.mxu0
    %v362 = vadd.f32 0.0, %v361
    %363 = vmatmul.f32.gmra.mxu0 %v156
    %v364 = vpop.f32.mrf.mxu0
    %v365 = vadd.f32 0.0, %v364
    %366 = vmatmul.f32.gmra.mxu0 %v159
    %v367 = vpop.f32.mrf.mxu0
    %v368 = vadd.f32 0.0, %v367
    %369 = vmatmul.f32.gmra.mxu0 %v162
    %v370 = vpop.f32.mrf.mxu0
    %v371 = vadd.f32 0.0, %v370
    %372 = vmatmul.f32.gmra.mxu0 %v165
    %v373 = vpop.f32.mrf.mxu0
    %v374 = vadd.f32 0.0, %v373
    %375 = vmatmul.f32.gmra.mxu0 %v168
    %v376 = vpop.f32.mrf.mxu0
    %v377 = vadd.f32 0.0, %v376
    %378 = vmatmul.f32.gmra.mxu0 %v171
    %v379 = vpop.f32.mrf.mxu0
    %v380 = vadd.f32 0.0, %v379
    %381 = vmatmul.f32.gmra.mxu0 %v174
    %v382 = vpop.f32.mrf.mxu0
    %v383 = vadd.f32 0.0, %v382
    %384 = vmatmul.f32.gmra.mxu0 %v177
    %v385 = vpop.f32.mrf.mxu0
    %v386 = vadd.f32 0.0, %v385
    %387 = vmatmul.f32.gmra.mxu0 %v180
    %v388 = vpop.f32.mrf.mxu0
    %v389 = vadd.f32 0.0, %v388
    %390 = vmatmul.f32.gmra.mxu0 %v183
    %v391 = vpop.f32.mrf.mxu0
    %v392 = vadd.f32 0.0, %v391
    %393 = vmatmul.f32.gmra.mxu0 %v186
    %v394 = vpop.f32.mrf.mxu0
    %v395 = vadd.f32 0.0, %v394
    %396 = vmatmul.f32.gmra.mxu0 %v189
    %v397 = vpop.f32.mrf.mxu0
    %v398 = vadd.f32 0.0, %v397
    %399 = vmatmul.f32.gmra.mxu0 %v192
    %v400 = vpop.f32.mrf.mxu0
    %v401 = vadd.f32 0.0, %v400
    %402 = vmatmul.f32.gmra.mxu0 %v195
    %v403 = vpop.f32.mrf.mxu0
    %v404 = vadd.f32 0.0, %v403
    %405 = vmatmul.f32.gmra.mxu0 %v198
    %v406 = vpop.f32.mrf.mxu0
    %v407 = vadd.f32 0.0, %v406
    %408 = vmatmul.f32.gmra.mxu0 %v201
    %v409 = vpop.f32.mrf.mxu0
    %v410 = vadd.f32 0.0, %v409
    %411 = vmatmul.f32.gmra.mxu0 %v204
    %v412 = vpop.f32.mrf.mxu0
    %v413 = vadd.f32 0.0, %v412
    %414 = vmatmul.f32.gmra.mxu0 %v207
    %v415 = vpop.f32.mrf.mxu0
    %v416 = vadd.f32 0.0, %v415
    %417 = vmatmul.f32.gmra.mxu0 %v210
    %v418 = vpop.f32.mrf.mxu0
    %v419 = vadd.f32 0.0, %v418
    %420 = vmatmul.f32.gmra.mxu0 %v213
    %v421 = vpop.f32.mrf.mxu0
    %v422 = vadd.f32 0.0, %v421
    %423 = vmatmul.f32.gmra.mxu0 %v216
    %v424 = vpop.f32.mrf.mxu0
    %v425 = vadd.f32 0.0, %v424
    %426 = vmatmul.f32.gmra.mxu0 %v219
    %v427 = vpop.f32.mrf.mxu0
    %v428 = vadd.f32 0.0, %v427
    %429 = vmatmul.f32.gmra.mxu0 %v222
    %v430 = vpop.f32.mrf.mxu0
    %v431 = vadd.f32 0.0, %v430
    %432 = vmatmul.f32.gmra.mxu0 %v225
    %v433 = vpop.f32.mrf.mxu0
    %v434 = vadd.f32 0.0, %v433
    %435 = vmatmul.f32.gmra.mxu0 %v228
    %v436 = vpop.f32.mrf.mxu0
    %v437 = vadd.f32 0.0, %v436
    %438 = vmatmul.f32.gmra.mxu0 %v231
    %v439 = vpop.f32.mrf.mxu0
    %v440 = vadd.f32 0.0, %v439
    %441 = vmatmul.f32.gmra.mxu0 %v234
    %v442 = vpop.f32.mrf.mxu0
    %v443 = vadd.f32 0.0, %v442
    %444 = vmatmul.f32.gmra.mxu0 %v237
    %v445 = vpop.f32.mrf.mxu0
    %v446 = vadd.f32 0.0, %v445
    %447 = vmatmul.f32.gmra.mxu0 %v240
    %v448 = vpop.f32.mrf.mxu0
    %v449 = vadd.f32 0.0, %v448
    %450 = vmatmul.f32.gmra.mxu0 %v243
    %v451 = vpop.f32.mrf.mxu0
    %v452 = vadd.f32 0.0, %v451
    %453 = vmatmul.f32.gmra.mxu0 %v246
    %v454 = vpop.f32.mrf.mxu0
    %v455 = vadd.f32 0.0, %v454
    %456 = vmatmul.f32.gmra.mxu0 %v249
    %v457 = vpop.f32.mrf.mxu0
    %v458 = vadd.f32 0.0, %v457
    %459 = vmatmul.f32.gmra.mxu0 %v252
    %v460 = vpop.f32.mrf.mxu0
    %v461 = vadd.f32 0.0, %v460
    %462 = vmatmul.f32.gmra.mxu0 %v255
    %v463 = vpop.f32.mrf.mxu0
    %v464 = vadd.f32 0.0, %v463
    %465 = vmatmul.f32.gmra.mxu0 %v258
    %v466 = vpop.f32.mrf.mxu0
    %v467 = vadd.f32 0.0, %v466
    %468 = vmatmul.f32.gmra.mxu0 %v261
    %v469 = vpop.f32.mrf.mxu0
    %v470 = vadd.f32 0.0, %v469
    %471 = vmatmul.f32.gmra.mxu0 %v264
    %v472 = vpop.f32.mrf.mxu0
    %v473 = vadd.f32 0.0, %v472
    %474 = vmatmul.f32.gmra.mxu0 %v267
    %v475 = vpop.f32.mrf.mxu0
    %v476 = vadd.f32 0.0, %v475
    %477 = vmatmul.f32.gmra.mxu0 %v270
    %v478 = vpop.f32.mrf.mxu0
    %v479 = vadd.f32 0.0, %v478
    %480 = vmatmul.f32.gmra.mxu0 %v273
    %v481 = vpop.f32.mrf.mxu0
    %v482 = vadd.f32 0.0, %v481
    %483 = vmatmul.f32.gmra.mxu0 %v276
    %v484 = vpop.f32.mrf.mxu0
    %v485 = vadd.f32 0.0, %v484
    %486 = vmatmul.f32.gmra.mxu0 %v279
    %v487 = vpop.f32.mrf.mxu0
    %v488 = vadd.f32 0.0, %v487
    %489 = vdwg.mxu0
    %vm490 = vcmask 31744
    %491 = vst.msk [vmem:[%s4] sm:$0xff] %vm490, %v299
    %492 = vst.msk [vmem:[%s4 + $0x8] sm:$0xff] %vm490, %v302
    %493 = vst.msk [vmem:[%s4 + $0x10] sm:$0xff] %vm490, %v305
    %494 = vst.msk [vmem:[%s4 + $0x18] sm:$0xff] %vm490, %v308
    %495 = vst.msk [vmem:[%s4 + $0x20] sm:$0xff] %vm490, %v311
    %496 = vst.msk [vmem:[%s4 + $0x28] sm:$0xff] %vm490, %v314
    %497 = vst.msk [vmem:[%s4 + $0x30] sm:$0xff] %vm490, %v317
    %498 = vst.msk [vmem:[%s4 + $0x38] sm:$0xff] %vm490, %v320
    %499 = vst.msk [vmem:[%s4 + $0x40] sm:$0xff] %vm490, %v323
    %500 = vst.msk [vmem:[%s4 + $0x48] sm:$0xff] %vm490, %v326
    %501 = vst.msk [vmem:[%s4 + $0x50] sm:$0xff] %vm490, %v329
    %502 = vst.msk [vmem:[%s4 + $0x58] sm:$0xff] %vm490, %v332
    %503 = vst.msk [vmem:[%s4 + $0x60] sm:$0xff] %vm490, %v335
    %504 = vst.msk [vmem:[%s4 + $0x68] sm:$0xff] %vm490, %v338
    %505 = vst.msk [vmem:[%s4 + $0x70] sm:$0xff] %vm490, %v341
    %506 = vst.msk [vmem:[%s4 + $0x78] sm:$0xff] %vm490, %v344
    %507 = vst.msk [vmem:[%s4 + $0x80] sm:$0xff] %vm490, %v347
    %508 = vst.msk [vmem:[%s4 + $0x88] sm:$0xff] %vm490, %v350
    %509 = vst.msk [vmem:[%s4 + $0x90] sm:$0xff] %vm490, %v353
    %510 = vst.msk [vmem:[%s4 + $0x98] sm:$0xff] %vm490, %v356
    %511 = vst.msk [vmem:[%s4 + $0xa0] sm:$0xff] %vm490, %v359
    %512 = vst.msk [vmem:[%s4 + $0xa8] sm:$0xff] %vm490, %v362
    %513 = vst.msk [vmem:[%s4 + $0xb0] sm:$0xff] %vm490, %v365
    %514 = vst.msk [vmem:[%s4 + $0xb8] sm:$0xff] %vm490, %v368
    %515 = vst.msk [vmem:[%s4 + $0xc0] sm:$0xff] %vm490, %v371
    %516 = vst.msk [vmem:[%s4 + $0xc8] sm:$0xff] %vm490, %v374
    %517 = vst.msk [vmem:[%s4 + $0xd0] sm:$0xff] %vm490, %v377
    %518 = vst.msk [vmem:[%s4 + $0xd8] sm:$0xff] %vm490, %v380
    %519 = vst.msk [vmem:[%s4 + $0xe0] sm:$0xff] %vm490, %v383
    %520 = vst.msk [vmem:[%s4 + $0xe8] sm:$0xff] %vm490, %v386
    %521 = vst.msk [vmem:[%s4 + $0xf0] sm:$0xff] %vm490, %v389
    %522 = vst.msk [vmem:[%s4 + $0xf8] sm:$0xff] %vm490, %v392
    %523 = vst.msk [vmem:[%s4 + $0x100] sm:$0xff] %vm490, %v395
    %524 = vst.msk [vmem:[%s4 + $0x108] sm:$0xff] %vm490, %v398
    %525 = vst.msk [vmem:[%s4 + $0x110] sm:$0xff] %vm490, %v401
    %526 = vst.msk [vmem:[%s4 + $0x118] sm:$0xff] %vm490, %v404
    %527 = vst.msk [vmem:[%s4 + $0x120] sm:$0xff] %vm490, %v407
    %528 = vst.msk [vmem:[%s4 + $0x128] sm:$0xff] %vm490, %v410
    %529 = vst.msk [vmem:[%s4 + $0x130] sm:$0xff] %vm490, %v413
    %530 = vst.msk [vmem:[%s4 + $0x138] sm:$0xff] %vm490, %v416
    %531 = vst.msk [vmem:[%s4 + $0x140] sm:$0xff] %vm490, %v419
    %532 = vst.msk [vmem:[%s4 + $0x148] sm:$0xff] %vm490, %v422
    %533 = vst.msk [vmem:[%s4 + $0x150] sm:$0xff] %vm490, %v425
    %534 = vst.msk [vmem:[%s4 + $0x158] sm:$0xff] %vm490, %v428
    %535 = vst.msk [vmem:[%s4 + $0x160] sm:$0xff] %vm490, %v431
    %536 = vst.msk [vmem:[%s4 + $0x168] sm:$0xff] %vm490, %v434
    %537 = vst.msk [vmem:[%s4 + $0x170] sm:$0xff] %vm490, %v437
    %538 = vst.msk [vmem:[%s4 + $0x178] sm:$0xff] %vm490, %v440
    %539 = vst.msk [vmem:[%s4 + $0x180] sm:$0xff] %vm490, %v443
    %540 = vst.msk [vmem:[%s4 + $0x188] sm:$0xff] %vm490, %v446
    %541 = vst.msk [vmem:[%s4 + $0x190] sm:$0xff] %vm490, %v449
    %542 = vst.msk [vmem:[%s4 + $0x198] sm:$0xff] %vm490, %v452
    %543 = vst.msk [vmem:[%s4 + $0x1a0] sm:$0xff] %vm490, %v455
    %544 = vst.msk [vmem:[%s4 + $0x1a8] sm:$0xff] %vm490, %v458
    %545 = vst.msk [vmem:[%s4 + $0x1b0] sm:$0xff] %vm490, %v461
    %546 = vst.msk [vmem:[%s4 + $0x1b8] sm:$0xff] %vm490, %v464
    %547 = vst.msk [vmem:[%s4 + $0x1c0] sm:$0xff] %vm490, %v467
    %548 = vst.msk [vmem:[%s4 + $0x1c8] sm:$0xff] %vm490, %v470
    %549 = vst.msk [vmem:[%s4 + $0x1d0] sm:$0xff] %vm490, %v473
    %550 = vst.msk [vmem:[%s4 + $0x1d8] sm:$0xff] %vm490, %v476
    %551 = vst.msk [vmem:[%s4 + $0x1e0] sm:$0xff] %vm490, %v479
    %552 = vst.msk [vmem:[%s4 + $0x1e8] sm:$0xff] %vm490, %v482
    %553 = vst.msk [vmem:[%s4 + $0x1f0] sm:$0xff] %vm490, %v485
    %554 = vst.msk [vmem:[%s4 + $0x1f8] sm:$0xff] %vm490, %v488
    %v555 = vsel %vm490, %v299, 0.0
    %v556 = vsel %vm490, %v302, 0.0
    %v557 = vadd.f32 %v555, %v556
    %v558 = vsel %vm490, %v305, 0.0
    %v559 = vadd.f32 %v557, %v558
    %v560 = vsel %vm490, %v308, 0.0
    %v561 = vadd.f32 %v559, %v560
    %v562 = vsel %vm490, %v311, 0.0
    %v563 = vadd.f32 %v561, %v562
    %v564 = vsel %vm490, %v314, 0.0
    %v565 = vadd.f32 %v563, %v564
    %v566 = vsel %vm490, %v317, 0.0
    %v567 = vadd.f32 %v565, %v566
    %v568 = vsel %vm490, %v320, 0.0
    %v569 = vadd.f32 %v567, %v568
    %v570 = vsel %vm490, %v323, 0.0
    %v571 = vadd.f32 %v569, %v570
    %v572 = vsel %vm490, %v326, 0.0
    %v573 = vadd.f32 %v571, %v572
    %v574 = vsel %vm490, %v329, 0.0
    %v575 = vadd.f32 %v573, %v574
    %v576 = vsel %vm490, %v332, 0.0
    %v577 = vadd.f32 %v575, %v576
    %v578 = vsel %vm490, %v335, 0.0
    %v579 = vadd.f32 %v577, %v578
    %v580 = vsel %vm490, %v338, 0.0
    %v581 = vadd.f32 %v579, %v580
    %v582 = vsel %vm490, %v341, 0.0
    %v583 = vadd.f32 %v581, %v582
    %v584 = vsel %vm490, %v344, 0.0
    %v585 = vadd.f32 %v583, %v584
    %v586 = vsel %vm490, %v347, 0.0
    %v587 = vadd.f32 %v585, %v586
    %v588 = vsel %vm490, %v350, 0.0
    %v589 = vadd.f32 %v587, %v588
    %v590 = vsel %vm490, %v353, 0.0
    %v591 = vadd.f32 %v589, %v590
    %v592 = vsel %vm490, %v356, 0.0
    %v593 = vadd.f32 %v591, %v592
    %v594 = vsel %vm490, %v359, 0.0
    %v595 = vadd.f32 %v593, %v594
    %v596 = vsel %vm490, %v362, 0.0
    %v597 = vadd.f32 %v595, %v596
    %v598 = vsel %vm490, %v365, 0.0
    %v599 = vadd.f32 %v597, %v598
    %v600 = vsel %vm490, %v368, 0.0
    %v601 = vadd.f32 %v599, %v600
    %v602 = vsel %vm490, %v371, 0.0
    %v603 = vadd.f32 %v601, %v602
    %v604 = vsel %vm490, %v374, 0.0
    %v605 = vadd.f32 %v603, %v604
    %v606 = vsel %vm490, %v377, 0.0
    %v607 = vadd.f32 %v605, %v606
    %v608 = vsel %vm490, %v380, 0.0
    %v609 = vadd.f32 %v607, %v608
    %v610 = vsel %vm490, %v383, 0.0
    %v611 = vadd.f32 %v609, %v610
    %v612 = vsel %vm490, %v386, 0.0
    %v613 = vadd.f32 %v611, %v612
    %v614 = vsel %vm490, %v389, 0.0
    %v615 = vadd.f32 %v613, %v614
    %v616 = vsel %vm490, %v392, 0.0
    %v617 = vadd.f32 %v615, %v616
    %v618 = vsel %vm490, %v395, 0.0
    %v619 = vadd.f32 %v617, %v618
    %v620 = vsel %vm490, %v398, 0.0
    %v621 = vadd.f32 %v619, %v620
    %v622 = vsel %vm490, %v401, 0.0
    %v623 = vadd.f32 %v621, %v622
    %v624 = vsel %vm490, %v404, 0.0
    %v625 = vadd.f32 %v623, %v624
    %v626 = vsel %vm490, %v407, 0.0
    %v627 = vadd.f32 %v625, %v626
    %v628 = vsel %vm490, %v410, 0.0
    %v629 = vadd.f32 %v627, %v628
    %v630 = vsel %vm490, %v413, 0.0
    %v631 = vadd.f32 %v629, %v630
    %v632 = vsel %vm490, %v416, 0.0
    %v633 = vadd.f32 %v631, %v632
    %v634 = vsel %vm490, %v419, 0.0
    %v635 = vadd.f32 %v633, %v634
    %v636 = vsel %vm490, %v422, 0.0
    %v637 = vadd.f32 %v635, %v636
    %v638 = vsel %vm490, %v425, 0.0
    %v639 = vadd.f32 %v637, %v638
    %v640 = vsel %vm490, %v428, 0.0
    %v641 = vadd.f32 %v639, %v640
    %v642 = vsel %vm490, %v431, 0.0
    %v643 = vadd.f32 %v641, %v642
    %v644 = vsel %vm490, %v434, 0.0
    %v645 = vadd.f32 %v643, %v644
    %v646 = vsel %vm490, %v437, 0.0
    %v647 = vadd.f32 %v645, %v646
    %v648 = vsel %vm490, %v440, 0.0
    %v649 = vadd.f32 %v647, %v648
    %v650 = vsel %vm490, %v443, 0.0
    %v651 = vadd.f32 %v649, %v650
    %v652 = vsel %vm490, %v446, 0.0
    %v653 = vadd.f32 %v651, %v652
    %v654 = vsel %vm490, %v449, 0.0
    %v655 = vadd.f32 %v653, %v654
    %v656 = vsel %vm490, %v452, 0.0
    %v657 = vadd.f32 %v655, %v656
    %v658 = vsel %vm490, %v455, 0.0
    %v659 = vadd.f32 %v657, %v658
    %v660 = vsel %vm490, %v458, 0.0
    %v661 = vadd.f32 %v659, %v660
    %v662 = vsel %vm490, %v461, 0.0
    %v663 = vadd.f32 %v661, %v662
    %v664 = vsel %vm490, %v464, 0.0
    %v665 = vadd.f32 %v663, %v664
    %v666 = vsel %vm490, %v467, 0.0
    %v667 = vadd.f32 %v665, %v666
    %v668 = vsel %vm490, %v470, 0.0
    %v669 = vadd.f32 %v667, %v668
    %v670 = vsel %vm490, %v473, 0.0
    %v671 = vadd.f32 %v669, %v670
    %v672 = vsel %vm490, %v476, 0.0
    %v673 = vadd.f32 %v671, %v672
    %v674 = vsel %vm490, %v479, 0.0
    %v675 = vadd.f32 %v673, %v674
    %v676 = vsel %vm490, %v482, 0.0
    %v677 = vadd.f32 %v675, %v676
    %v678 = vsel %vm490, %v485, 0.0
    %v679 = vadd.f32 %v677, %v678
    %v680 = vsel %vm490, %v488, 0.0
    %v681 = vadd.f32 %v679, %v680
    %v682 = vrot.slane %v681, 4
    %v683 = vadd.f32 %v681, %v682
    %v684 = vrot.slane %v683, 2
    %v685 = vadd.f32 %v683, %v684
    %v686 = vrot.slane %v685, 1
    %v687 = vadd.f32 %v685, %v686
    %vm688 = vcmask 24576
    %689 = vst.msk [vmem:[#allocation2] sm:$0x1] %vm688, %v687
    %v690 = vmul.f32 %v299, %v299
    %v691 = vmul.f32 %v302, %v302
    %v692 = vmul.f32 %v305, %v305
    %v693 = vmul.f32 %v308, %v308
    %v694 = vmul.f32 %v311, %v311
    %v695 = vmul.f32 %v314, %v314
    %v696 = vmul.f32 %v317, %v317
    %v697 = vmul.f32 %v320, %v320
    %v698 = vmul.f32 %v323, %v323
    %v699 = vmul.f32 %v326, %v326
    %v700 = vmul.f32 %v329, %v329
    %v701 = vmul.f32 %v332, %v332
    %v702 = vmul.f32 %v335, %v335
    %v703 = vmul.f32 %v338, %v338
    %v704 = vmul.f32 %v341, %v341
    %v705 = vmul.f32 %v344, %v344
    %v706 = vmul.f32 %v347, %v347
    %v707 = vmul.f32 %v350, %v350
    %v708 = vmul.f32 %v353, %v353
    %v709 = vmul.f32 %v356, %v356
    %v710 = vmul.f32 %v359, %v359
    %v711 = vmul.f32 %v362, %v362
    %v712 = vmul.f32 %v365, %v365
    %v713 = vmul.f32 %v368, %v368
    %v714 = vmul.f32 %v371, %v371
    %v715 = vmul.f32 %v374, %v374
    %v716 = vmul.f32 %v377, %v377
    %v717 = vmul.f32 %v380, %v380
    %v718 = vmul.f32 %v383, %v383
    %v719 = vmul.f32 %v386, %v386
    %v720 = vmul.f32 %v389, %v389
    %v721 = vmul.f32 %v392, %v392
    %v722 = vmul.f32 %v395, %v395
    %v723 = vmul.f32 %v398, %v398
    %v724 = vmul.f32 %v401, %v401
    %v725 = vmul.f32 %v404, %v404
    %v726 = vmul.f32 %v407, %v407
    %v727 = vmul.f32 %v410, %v410
    %v728 = vmul.f32 %v413, %v413
    %v729 = vmul.f32 %v416, %v416
    %v730 = vmul.f32 %v419, %v419
    %v731 = vmul.f32 %v422, %v422
    %v732 = vmul.f32 %v425, %v425
    %v733 = vmul.f32 %v428, %v428
    %v734 = vmul.f32 %v431, %v431
    %v735 = vmul.f32 %v434, %v434
    %v736 = vmul.f32 %v437, %v437
    %v737 = vmul.f32 %v440, %v440
    %v738 = vmul.f32 %v443, %v443
    %v739 = vmul.f32 %v446, %v446
    %v740 = vmul.f32 %v449, %v449
    %v741 = vmul.f32 %v452, %v452
    %v742 = vmul.f32 %v455, %v455
    %v743 = vmul.f32 %v458, %v458
    %v744 = vmul.f32 %v461, %v461
    %v745 = vmul.f32 %v464, %v464
    %v746 = vmul.f32 %v467, %v467
    %v747 = vmul.f32 %v470, %v470
    %v748 = vmul.f32 %v473, %v473
    %v749 = vmul.f32 %v476, %v476
    %v750 = vmul.f32 %v479, %v479
    %v751 = vmul.f32 %v482, %v482
    %v752 = vmul.f32 %v485, %v485
    %v753 = vmul.f32 %v488, %v488
    %v754 = vsel %vm490, %v690, 0.0
    %v755 = vsel %vm490, %v691, 0.0
    %v756 = vadd.f32 %v754, %v755
    %v757 = vsel %vm490, %v692, 0.0
    %v758 = vadd.f32 %v756, %v757
    %v759 = vsel %vm490, %v693, 0.0
    %v760 = vadd.f32 %v758, %v759
    %v761 = vsel %vm490, %v694, 0.0
    %v762 = vadd.f32 %v760, %v761
    %v763 = vsel %vm490, %v695, 0.0
    %v764 = vadd.f32 %v762, %v763
    %v765 = vsel %vm490, %v696, 0.0
    %v766 = vadd.f32 %v764, %v765
    %v767 = vsel %vm490, %v697, 0.0
    %v768 = vadd.f32 %v766, %v767
    %v769 = vsel %vm490, %v698, 0.0
    %v770 = vadd.f32 %v768, %v769
    %v771 = vsel %vm490, %v699, 0.0
    %v772 = vadd.f32 %v770, %v771
    %v773 = vsel %vm490, %v700, 0.0
    %v774 = vadd.f32 %v772, %v773
    %v775 = vsel %vm490, %v701, 0.0
    %v776 = vadd.f32 %v774, %v775
    %v777 = vsel %vm490, %v702, 0.0
    %v778 = vadd.f32 %v776, %v777
    %v779 = vsel %vm490, %v703, 0.0
    %v780 = vadd.f32 %v778, %v779
    %v781 = vsel %vm490, %v704, 0.0
    %v782 = vadd.f32 %v780, %v781
    %v783 = vsel %vm490, %v705, 0.0
    %v784 = vadd.f32 %v782, %v783
    %v785 = vsel %vm490, %v706, 0.0
    %v786 = vadd.f32 %v784, %v785
    %v787 = vsel %vm490, %v707, 0.0
    %v788 = vadd.f32 %v786, %v787
    %v789 = vsel %vm490, %v708, 0.0
    %v790 = vadd.f32 %v788, %v789
    %v791 = vsel %vm490, %v709, 0.0
    %v792 = vadd.f32 %v790, %v791
    %v793 = vsel %vm490, %v710, 0.0
    %v794 = vadd.f32 %v792, %v793
    %v795 = vsel %vm490, %v711, 0.0
    %v796 = vadd.f32 %v794, %v795
    %v797 = vsel %vm490, %v712, 0.0
    %v798 = vadd.f32 %v796, %v797
    %v799 = vsel %vm490, %v713, 0.0
    %v800 = vadd.f32 %v798, %v799
    %v801 = vsel %vm490, %v714, 0.0
    %v802 = vadd.f32 %v800, %v801
    %v803 = vsel %vm490, %v715, 0.0
    %v804 = vadd.f32 %v802, %v803
    %v805 = vsel %vm490, %v716, 0.0
    %v806 = vadd.f32 %v804, %v805
    %v807 = vsel %vm490, %v717, 0.0
    %v808 = vadd.f32 %v806, %v807
    %v809 = vsel %vm490, %v718, 0.0
    %v810 = vadd.f32 %v808, %v809
    %v811 = vsel %vm490, %v719, 0.0
    %v812 = vadd.f32 %v810, %v811
    %v813 = vsel %vm490, %v720, 0.0
    %v814 = vadd.f32 %v812, %v813
    %v815 = vsel %vm490, %v721, 0.0
    %v816 = vadd.f32 %v814, %v815
    %v817 = vsel %vm490, %v722, 0.0
    %v818 = vadd.f32 %v816, %v817
    %v819 = vsel %vm490, %v723, 0.0
    %v820 = vadd.f32 %v818, %v819
    %v821 = vsel %vm490, %v724, 0.0
    %v822 = vadd.f32 %v820, %v821
    %v823 = vsel %vm490, %v725, 0.0
    %v824 = vadd.f32 %v822, %v823
    %v825 = vsel %vm490, %v726, 0.0
    %v826 = vadd.f32 %v824, %v825
    %v827 = vsel %vm490, %v727, 0.0
    %v828 = vadd.f32 %v826, %v827
    %v829 = vsel %vm490, %v728, 0.0
    %v830 = vadd.f32 %v828, %v829
    %v831 = vsel %vm490, %v729, 0.0
    %v832 = vadd.f32 %v830, %v831
    %v833 = vsel %vm490, %v730, 0.0
    %v834 = vadd.f32 %v832, %v833
    %v835 = vsel %vm490, %v731, 0.0
    %v836 = vadd.f32 %v834, %v835
    %v837 = vsel %vm490, %v732, 0.0
    %v838 = vadd.f32 %v836, %v837
    %v839 = vsel %vm490, %v733, 0.0
    %v840 = vadd.f32 %v838, %v839
    %v841 = vsel %vm490, %v734, 0.0
    %v842 = vadd.f32 %v840, %v841
    %v843 = vsel %vm490, %v735, 0.0
    %v844 = vadd.f32 %v842, %v843
    %v845 = vsel %vm490, %v736, 0.0
    %v846 = vadd.f32 %v844, %v845
    %v847 = vsel %vm490, %v737, 0.0
    %v848 = vadd.f32 %v846, %v847
    %v849 = vsel %vm490, %v738, 0.0
    %v850 = vadd.f32 %v848, %v849
    %v851 = vsel %vm490, %v739, 0.0
    %v852 = vadd.f32 %v850, %v851
    %v853 = vsel %vm490, %v740, 0.0
    %v854 = vadd.f32 %v852, %v853
    %v855 = vsel %vm490, %v741, 0.0
    %v856 = vadd.f32 %v854, %v855
    %v857 = vsel %vm490, %v742, 0.0
    %v858 = vadd.f32 %v856, %v857
    %v859 = vsel %vm490, %v743, 0.0
    %v860 = vadd.f32 %v858, %v859
    %v861 = vsel %vm490, %v744, 0.0
    %v862 = vadd.f32 %v860, %v861
    %v863 = vsel %vm490, %v745, 0.0
    %v864 = vadd.f32 %v862, %v863
    %v865 = vsel %vm490, %v746, 0.0
    %v866 = vadd.f32 %v864, %v865
    %v867 = vsel %vm490, %v747, 0.0
    %v868 = vadd.f32 %v866, %v867
    %v869 = vsel %vm490, %v748, 0.0
    %v870 = vadd.f32 %v868, %v869
    %v871 = vsel %vm490, %v749, 0.0
    %v872 = vadd.f32 %v870, %v871
    %v873 = vsel %vm490, %v750, 0.0
    %v874 = vadd.f32 %v872, %v873
    %v875 = vsel %vm490, %v751, 0.0
    %v876 = vadd.f32 %v874, %v875
    %v877 = vsel %vm490, %v752, 0.0
    %v878 = vadd.f32 %v876, %v877
    %v879 = vsel %vm490, %v753, 0.0
    %v880 = vadd.f32 %v878, %v879
    %v881 = vrot.slane %v880, 4
    %v882 = vadd.f32 %v880, %v881
    %v883 = vrot.slane %v882, 2
    %v884 = vadd.f32 %v882, %v883
    %v885 = vrot.slane %v884, 1
    %v886 = vadd.f32 %v884, %v885
    %887 = vst.msk [vmem:[#allocation4] sm:$0x1] %vm688, %v886
    // Predicated region
    $region18: #{tpu_custom_call.1} parent=1 // pred_check
      _
    $region19: #{tpu_custom_call.1} parent=1 // pred_check_branch
      %889 = sbr.rel (0) target = $region21
    $region20: #{tpu_custom_call.1} parent=1 // pred_region
      _
    $region21: #{tpu_custom_call.1} parent=1 // pred_fallthru
      _
    // Predicated region
    $region22: #{tpu_custom_call.1} parent=1 // pred_check
      _
    $region23: #{tpu_custom_call.1} parent=1 // pred_check_branch
      %891 = sbr.rel (0) target = $region25
    $region24: #{tpu_custom_call.1} parent=1 // pred_region
      %893 = vsyncadd [#allocation3], 0
      %s895 = sshll.u32 [#allocation2], 4
      %s896 = int_to_ptr.vmem [resolvable:$true] %s895
      %s897 = sshll.u32 %s5, 4
      %s898 = int_to_ptr.hbm [resolvable:$true] %s897
      %900 = dma.vmem_to_hbm [thread:$0]  %s896, 16, %s898, [#allocation3]
    $region25: #{tpu_custom_call.1} parent=1 // pred_fallthru
      _
    // Predicated region
    $region26: #{tpu_custom_call.1} parent=1 // pred_check
      _
    $region27: #{tpu_custom_call.1} parent=1 // pred_check_branch
      %902 = sbr.rel (0) target = $region29
    $region28: #{tpu_custom_call.1} parent=1 // pred_region
      %904 = vsyncadd [#allocation5], 0
      %s906 = sshll.u32 [#allocation4], 4
      %s907 = int_to_ptr.vmem [resolvable:$true] %s906
      %s908 = sshll.u32 %s6, 4
      %s909 = int_to_ptr.hbm [resolvable:$true] %s908
      %911 = dma.vmem_to_hbm [thread:$0]  %s907, 16, %s909, [#allocation5]
    $region29: #{tpu_custom_call.1} parent=1 // pred_fallthru
      _
    // Predicated region
    $region30: #{tpu_custom_call.1} parent=1 // pred_check
      _
    $region31: #{tpu_custom_call.1} parent=1 // pred_check_branch
      %913 = sbr.rel (0) target = $region33
    $region32: #{tpu_custom_call.1} parent=1 // pred_region
      _
    $region33: #{tpu_custom_call.1} parent=1 // pred_fallthru
      _
    // Predicated region
    $region34: #{tpu_custom_call.1} parent=1 // pred_check
      _
    $region35: #{tpu_custom_call.1} parent=1 // pred_check_branch
      %915 = sbr.rel (0) target = $region37
    $region36: #{tpu_custom_call.1} parent=1 // pred_region
      %917 = dma.done [#allocation3], 16
    $region37: #{tpu_custom_call.1} parent=1 // pred_fallthru
      _
    // Predicated region
    $region38: #{tpu_custom_call.1} parent=1 // pred_check
      _
    $region39: #{tpu_custom_call.1} parent=1 // pred_check_branch
      %919 = sbr.rel (0) target = $region41
    $region40: #{tpu_custom_call.1} parent=1 // pred_region
      %921 = dma.done [#allocation5], 16
    $region41: #{tpu_custom_call.1} parent=1 // pred_fallthru
      _
    %922 = vsyncpa [#allocation3], 1
    %923 = vsyncpa [#allocation5], 1

</llo_original>
